<compile_context>
chip_gen: v7x
topology: tpu7x:2x2x1
jax: 0.10.0
libtpu: 0.0.40
codegen_flags: <defaults>
</compile_context>

<pallas_src>
import jax
import jax.numpy as jnp
from jax.experimental import pallas as pl
from jax.experimental.pallas import tpu as pltpu

_IN = 5     # state dim
_HID = 10   # fc1 width
_OUT = 2    # fused [mu, sigma] head width


def _round_up(n, m):
    return ((n + m - 1) // m) * m


def _make_actor_kernel(tb, chunk):
    """Kernel closure for a (5, tb) input block, processed in `chunk`-lane pieces."""
    assert tb % chunk == 0
    nchunks = tb // chunk

    def kernel(x_ref, p1_ref, p2_ref, out_ref):
        # p1: (10, 6)  -- cols 0..4 = fc1 weight (out x in), col 5 = fc1 bias
        # p2: (2, 11)  -- rows = [mu, sigma] heads, cols 0..9 = weights (pre-scaled by
        #                 [160, 2]), col 10 = bias (pre-scaled)
        p1 = p1_ref[...].astype(jnp.float32)
        p2 = p2_ref[...].astype(jnp.float32)

        # Hoist the per-k weight columns (JAX does not CSE these) and the bias broadcasts.
        w1_cols = [p1[:, k:k + 1] for k in range(_IN)]        # each (10, 1)
        wh_cols = [p2[:, k:k + 1] for k in range(_HID)]       # each (2, 1)
        h0 = jnp.broadcast_to(p1[:, _IN:_IN + 1], (_HID, chunk))   # fc1 bias, (10, chunk)
        z0 = jnp.broadcast_to(p2[:, _HID:_HID + 1], (_OUT, chunk))  # head bias, (2, chunk)

        # Static chunk loop keeps live vregs small while the DMA block stays large.
        for c in range(nchunks):
            lo, hi = c * chunk, (c + 1) * chunk
            x = x_ref[:, lo:hi].astype(jnp.float32)            # (5, chunk), in-kernel upcast

            # fc1: sigmoid(W1 @ x + b1) as unrolled VPU broadcast-FMAs (K = 5).
            h = h0
            for k in range(_IN):
                h = h + w1_cols[k] * x[k:k + 1, :]
            h = jax.nn.sigmoid(h)                              # (10, chunk) — EUP

            # Fused, pre-scaled heads (K = 10, N = 2), again on the VPU.
            z = z0
            for k in range(_HID):
                z = z + wh_cols[k] * h[k:k + 1, :]

            out_ref[:, lo:hi] = jnp.abs(z)                     # scales already folded in

    return kernel


def actor_net_forward(x, params, tb_max=16384, chunk=1024):
    """Returns (mu, sigma) — the parameters of the Normal distribution.

    x: (B, 5). tb_max: batch-lane tile per grid step (use larger, e.g. 32K, on v7x;
    8K-16K is plenty on v5e/v6e). chunk: in-kernel lane chunk (multiple of 128).
    """
    w1, b1, wmu, bmu, wsig, bsig = params

    # Pack parameters into two small resident operands; fold the [160, 2] epilogue scales.
    p1 = jnp.concatenate([w1.T, b1.T], axis=1).astype(jnp.float32)          # (10, 6)
    head_w = jnp.concatenate([wmu, wsig], axis=1).T                         # (2, 10)
    head_b = jnp.concatenate([bmu, bsig], axis=1).T                         # (2, 1)
    scale = jnp.array([[160.0], [2.0]], jnp.float32)
    p2 = (jnp.concatenate([head_w, head_b], axis=1) * scale).astype(jnp.float32)  # (2, 11)

    assert x.ndim == 2 and x.shape[1] == _IN, "x must be (B, 5)"
    B = x.shape[0]
    xt = x.T                                   # (5, B): batch on the 128-lane axis

    chunk = max(128, (int(chunk) // 128) * 128)
    if B <= chunk:
        tb = B                                 # single block == full array dim (layout-legal)
        kchunk = B
    else:
        tb_cap = max(chunk, (int(tb_max) // chunk) * chunk)
        tb = min(tb_cap, _round_up(B, chunk))  # multiple of chunk (=> multiple of 128)
        kchunk = chunk
    grid = pl.cdiv(B, tb)                      # no padding; edge block partially valid

    out = pl.pallas_call(
        _make_actor_kernel(tb, kchunk),
        out_shape=jax.ShapeDtypeStruct((_OUT, B), jnp.float32),
        grid=(grid,),
        in_specs=[
            pl.BlockSpec((_IN, tb), lambda i: (0, i)),           # x tile streams over batch
            pl.BlockSpec((_HID, _IN + 1), lambda i: (0, 0)),     # packed fc1 params, resident
            pl.BlockSpec((_OUT, _HID + 1), lambda i: (0, 0)),    # packed head params, resident
        ],
        out_specs=pl.BlockSpec((_OUT, tb), lambda i: (0, i)),
        compiler_params=pltpu.CompilerParams(
            dimension_semantics=("parallel",)),                  # shard batch across TCs on v7x
    )(xt, p1, p2)

    mu = out[0:1, :].T                          # (B, 1)
    sigma = out[1:2, :].T                       # (B, 1)
    # TODO(synk): torch.distributions.Normal has no array equivalent; (mu, sigma) fully
    # parameterize it.
    return mu, sigma


def init_params(key):
    """Deterministic init matching PyTorch Linear default (uniform ±1/sqrt(fan_in))."""
    ks = jax.random.split(key, 6)

    def uniform(k, shape, fan_in):
        bound = 1.0 / jnp.sqrt(float(fan_in))
        return jax.random.uniform(k, shape, jnp.float32, -bound, bound)

    w1   = uniform(ks[0], (_IN, _HID), _IN)     # fc1 weight (stored transposed: in x out)
    b1   = uniform(ks[1], (1, _HID), _IN)       # fc1 bias
    wmu  = uniform(ks[2], (_HID, 1), _HID)      # mu_head weight (transposed)
    bmu  = uniform(ks[3], (1, 1), _HID)         # mu_head bias
    wsig = uniform(ks[4], (_HID, 1), _HID)      # sigma_head weight (transposed)
    bsig = uniform(ks[5], (1, 1), _HID)         # sigma_head bias
    return (w1, b1, wmu, bmu, wsig, bsig)


def reference_forward(x, params):
    """Pure-JAX reference of the PyTorch forward pass."""
    w1, b1, wmu, bmu, wsig, bsig = params
    h = jax.nn.sigmoid(x @ w1 + b1)
    mu = 160.0 * jnp.abs(h @ wmu + bmu)
    sigma = 2.0 * jnp.abs(h @ wsig + bsig)
    return mu, sigma


if __name__ == "__main__":
    key = jax.random.PRNGKey(0)
    k_param, k_x = jax.random.split(key)

    params = init_params(k_param)

    # Small batch: single grid step, single in-kernel chunk.
    x = jax.random.normal(k_x, (8, _IN), jnp.float32)
    mu, sigma = actor_net_forward(x, params)
    jax.block_until_ready((mu, sigma))
    mu_ref, sigma_ref = reference_forward(x, params)
    assert jnp.allclose(mu, mu_ref, atol=1e-4, rtol=1e-4), "mu mismatch"
    assert jnp.allclose(sigma, sigma_ref, atol=1e-4, rtol=1e-4), "sigma mismatch"

    # Ragged batch exercising the batch grid, the partial (masked) edge block and the
    # in-kernel chunk loop: tb=256, chunk=128 -> 2 grid steps, 2 chunks/step, 44-lane tail.
    x2 = jax.random.normal(jax.random.PRNGKey(1), (300, _IN), jnp.float32)
    mu2, sigma2 = actor_net_forward(x2, params, tb_max=256, chunk=128)
    jax.block_until_ready((mu2, sigma2))
    mu2_ref, sigma2_ref = reference_forward(x2, params)
    assert jnp.allclose(mu2, mu2_ref, atol=1e-4, rtol=1e-4), "mu mismatch (grid)"
    assert jnp.allclose(sigma2, sigma2_ref, atol=1e-4, rtol=1e-4), "sigma mismatch (grid)"

    print("KERNEL_OK")
</pallas_src>

<mosaic_0001>
module attributes {stable_mosaic.version = 11 : i64} {
  func.func @kernel(%arg0: i32, %arg1: memref<5x8xf32, #tpu.memory_space<vmem>>, %arg2: memref<10x6xf32, #tpu.memory_space<vmem>>, %arg3: memref<2x11xf32, #tpu.memory_space<vmem>>, %arg4: memref<2x8xf32, #tpu.memory_space<vmem>>) attributes {dimension_semantics = [#tpu.dimension_semantics<parallel>], iteration_bounds = array<i64: 1>, scalar_prefetch = 0 : i64, scratch_operands = 0 : i64, tpu.core_type = #tpu.core_type<tc>, window_params = [{transform_indices = @transform_0, window_bounds = array<i64: 5, 8>}, {pipeline_mode = #tpu.pipeline_mode<synchronous>, transform_indices = @transform_1, window_bounds = array<i64: 10, 6>}, {pipeline_mode = #tpu.pipeline_mode<synchronous>, transform_indices = @transform_2, window_bounds = array<i64: 2, 11>}, {transform_indices = @transform_3, window_bounds = array<i64: 2, 8>}]} {
    %c0 = arith.constant 0 : index
    %c0_0 = arith.constant 0 : index
    %0 = vector.load %arg2[%c0, %c0_0] : memref<10x6xf32, #tpu.memory_space<vmem>>, vector<10x6xf32>
    %c0_1 = arith.constant 0 : index
    %c0_2 = arith.constant 0 : index
    %1 = vector.load %arg3[%c0_1, %c0_2] : memref<2x11xf32, #tpu.memory_space<vmem>>, vector<2x11xf32>
    %2 = vector.extract_strided_slice %0 {offsets = [0, 0], sizes = [10, 1], strides = [1, 1]} : vector<10x6xf32> to vector<10x1xf32>
    %3 = vector.extract_strided_slice %0 {offsets = [0, 1], sizes = [10, 1], strides = [1, 1]} : vector<10x6xf32> to vector<10x1xf32>
    %4 = vector.extract_strided_slice %0 {offsets = [0, 2], sizes = [10, 1], strides = [1, 1]} : vector<10x6xf32> to vector<10x1xf32>
    %5 = vector.extract_strided_slice %0 {offsets = [0, 3], sizes = [10, 1], strides = [1, 1]} : vector<10x6xf32> to vector<10x1xf32>
    %6 = vector.extract_strided_slice %0 {offsets = [0, 4], sizes = [10, 1], strides = [1, 1]} : vector<10x6xf32> to vector<10x1xf32>
    %7 = vector.extract_strided_slice %1 {offsets = [0, 0], sizes = [2, 1], strides = [1, 1]} : vector<2x11xf32> to vector<2x1xf32>
    %8 = vector.extract_strided_slice %1 {offsets = [0, 1], sizes = [2, 1], strides = [1, 1]} : vector<2x11xf32> to vector<2x1xf32>
    %9 = vector.extract_strided_slice %1 {offsets = [0, 2], sizes = [2, 1], strides = [1, 1]} : vector<2x11xf32> to vector<2x1xf32>
    %10 = vector.extract_strided_slice %1 {offsets = [0, 3], sizes = [2, 1], strides = [1, 1]} : vector<2x11xf32> to vector<2x1xf32>
    %11 = vector.extract_strided_slice %1 {offsets = [0, 4], sizes = [2, 1], strides = [1, 1]} : vector<2x11xf32> to vector<2x1xf32>
    %12 = vector.extract_strided_slice %1 {offsets = [0, 5], sizes = [2, 1], strides = [1, 1]} : vector<2x11xf32> to vector<2x1xf32>
    %13 = vector.extract_strided_slice %1 {offsets = [0, 6], sizes = [2, 1], strides = [1, 1]} : vector<2x11xf32> to vector<2x1xf32>
    %14 = vector.extract_strided_slice %1 {offsets = [0, 7], sizes = [2, 1], strides = [1, 1]} : vector<2x11xf32> to vector<2x1xf32>
    %15 = vector.extract_strided_slice %1 {offsets = [0, 8], sizes = [2, 1], strides = [1, 1]} : vector<2x11xf32> to vector<2x1xf32>
    %16 = vector.extract_strided_slice %1 {offsets = [0, 9], sizes = [2, 1], strides = [1, 1]} : vector<2x11xf32> to vector<2x1xf32>
    %17 = vector.extract_strided_slice %0 {offsets = [0, 5], sizes = [10, 1], strides = [1, 1]} : vector<10x6xf32> to vector<10x1xf32>
    %18 = vector.shape_cast %17 : vector<10x1xf32> to vector<10x1xf32>
    %19 = vector.broadcast %18 : vector<10x1xf32> to vector<10x8xf32>
    %20 = vector.extract_strided_slice %1 {offsets = [0, 10], sizes = [2, 1], strides = [1, 1]} : vector<2x11xf32> to vector<2x1xf32>
    %21 = vector.shape_cast %20 : vector<2x1xf32> to vector<2x1xf32>
    %22 = vector.broadcast %21 : vector<2x1xf32> to vector<2x8xf32>
    %c0_3 = arith.constant 0 : index
    %c0_4 = arith.constant 0 : index
    %23 = vector.load %arg1[%c0_3, %c0_4] : memref<5x8xf32, #tpu.memory_space<vmem>>, vector<5x8xf32>
    %24 = vector.extract_strided_slice %23 {offsets = [0, 0], sizes = [1, 8], strides = [1, 1]} : vector<5x8xf32> to vector<1x8xf32>
    %25 = vector.broadcast %2 : vector<10x1xf32> to vector<10x8xf32>
    %26 = vector.broadcast %24 : vector<1x8xf32> to vector<10x8xf32>
    %27 = arith.mulf %25, %26 : vector<10x8xf32>
    %28 = arith.addf %19, %27 : vector<10x8xf32>
    %29 = vector.extract_strided_slice %23 {offsets = [1, 0], sizes = [1, 8], strides = [1, 1]} : vector<5x8xf32> to vector<1x8xf32>
    %30 = vector.broadcast %3 : vector<10x1xf32> to vector<10x8xf32>
    %31 = vector.broadcast %29 : vector<1x8xf32> to vector<10x8xf32>
    %32 = arith.mulf %30, %31 : vector<10x8xf32>
    %33 = arith.addf %28, %32 : vector<10x8xf32>
    %34 = vector.extract_strided_slice %23 {offsets = [2, 0], sizes = [1, 8], strides = [1, 1]} : vector<5x8xf32> to vector<1x8xf32>
    %35 = vector.broadcast %4 : vector<10x1xf32> to vector<10x8xf32>
    %36 = vector.broadcast %34 : vector<1x8xf32> to vector<10x8xf32>
    %37 = arith.mulf %35, %36 : vector<10x8xf32>
    %38 = arith.addf %33, %37 : vector<10x8xf32>
    %39 = vector.extract_strided_slice %23 {offsets = [3, 0], sizes = [1, 8], strides = [1, 1]} : vector<5x8xf32> to vector<1x8xf32>
    %40 = vector.broadcast %5 : vector<10x1xf32> to vector<10x8xf32>
    %41 = vector.broadcast %39 : vector<1x8xf32> to vector<10x8xf32>
    %42 = arith.mulf %40, %41 : vector<10x8xf32>
    %43 = arith.addf %38, %42 : vector<10x8xf32>
    %44 = vector.extract_strided_slice %23 {offsets = [4, 0], sizes = [1, 8], strides = [1, 1]} : vector<5x8xf32> to vector<1x8xf32>
    %45 = vector.broadcast %6 : vector<10x1xf32> to vector<10x8xf32>
    %46 = vector.broadcast %44 : vector<1x8xf32> to vector<10x8xf32>
    %47 = arith.mulf %45, %46 : vector<10x8xf32>
    %48 = arith.addf %43, %47 : vector<10x8xf32>
    %49 = arith.negf %48 : vector<10x8xf32>
    %50 = math.exp %49 : vector<10x8xf32>
    %cst = arith.constant 1.000000e+00 : f32
    %51 = vector.broadcast %cst : f32 to vector<10x8xf32>
    %52 = arith.addf %51, %50 : vector<10x8xf32>
    %53 = arith.divf %51, %52 : vector<10x8xf32>
    %54 = vector.extract_strided_slice %53 {offsets = [0, 0], sizes = [1, 8], strides = [1, 1]} : vector<10x8xf32> to vector<1x8xf32>
    %55 = vector.broadcast %7 : vector<2x1xf32> to vector<2x8xf32>
    %56 = vector.broadcast %54 : vector<1x8xf32> to vector<2x8xf32>
    %57 = arith.mulf %55, %56 : vector<2x8xf32>
    %58 = arith.addf %22, %57 : vector<2x8xf32>
    %59 = vector.extract_strided_slice %53 {offsets = [1, 0], sizes = [1, 8], strides = [1, 1]} : vector<10x8xf32> to vector<1x8xf32>
    %60 = vector.broadcast %8 : vector<2x1xf32> to vector<2x8xf32>
    %61 = vector.broadcast %59 : vector<1x8xf32> to vector<2x8xf32>
    %62 = arith.mulf %60, %61 : vector<2x8xf32>
    %63 = arith.addf %58, %62 : vector<2x8xf32>
    %64 = vector.extract_strided_slice %53 {offsets = [2, 0], sizes = [1, 8], strides = [1, 1]} : vector<10x8xf32> to vector<1x8xf32>
    %65 = vector.broadcast %9 : vector<2x1xf32> to vector<2x8xf32>
    %66 = vector.broadcast %64 : vector<1x8xf32> to vector<2x8xf32>
    %67 = arith.mulf %65, %66 : vector<2x8xf32>
    %68 = arith.addf %63, %67 : vector<2x8xf32>
    %69 = vector.extract_strided_slice %53 {offsets = [3, 0], sizes = [1, 8], strides = [1, 1]} : vector<10x8xf32> to vector<1x8xf32>
    %70 = vector.broadcast %10 : vector<2x1xf32> to vector<2x8xf32>
    %71 = vector.broadcast %69 : vector<1x8xf32> to vector<2x8xf32>
    %72 = arith.mulf %70, %71 : vector<2x8xf32>
    %73 = arith.addf %68, %72 : vector<2x8xf32>
    %74 = vector.extract_strided_slice %53 {offsets = [4, 0], sizes = [1, 8], strides = [1, 1]} : vector<10x8xf32> to vector<1x8xf32>
    %75 = vector.broadcast %11 : vector<2x1xf32> to vector<2x8xf32>
    %76 = vector.broadcast %74 : vector<1x8xf32> to vector<2x8xf32>
    %77 = arith.mulf %75, %76 : vector<2x8xf32>
    %78 = arith.addf %73, %77 : vector<2x8xf32>
    %79 = vector.extract_strided_slice %53 {offsets = [5, 0], sizes = [1, 8], strides = [1, 1]} : vector<10x8xf32> to vector<1x8xf32>
    %80 = vector.broadcast %12 : vector<2x1xf32> to vector<2x8xf32>
    %81 = vector.broadcast %79 : vector<1x8xf32> to vector<2x8xf32>
    %82 = arith.mulf %80, %81 : vector<2x8xf32>
    %83 = arith.addf %78, %82 : vector<2x8xf32>
    %84 = vector.extract_strided_slice %53 {offsets = [6, 0], sizes = [1, 8], strides = [1, 1]} : vector<10x8xf32> to vector<1x8xf32>
    %85 = vector.broadcast %13 : vector<2x1xf32> to vector<2x8xf32>
    %86 = vector.broadcast %84 : vector<1x8xf32> to vector<2x8xf32>
    %87 = arith.mulf %85, %86 : vector<2x8xf32>
    %88 = arith.addf %83, %87 : vector<2x8xf32>
    %89 = vector.extract_strided_slice %53 {offsets = [7, 0], sizes = [1, 8], strides = [1, 1]} : vector<10x8xf32> to vector<1x8xf32>
    %90 = vector.broadcast %14 : vector<2x1xf32> to vector<2x8xf32>
    %91 = vector.broadcast %89 : vector<1x8xf32> to vector<2x8xf32>
    %92 = arith.mulf %90, %91 : vector<2x8xf32>
    %93 = arith.addf %88, %92 : vector<2x8xf32>
    %94 = vector.extract_strided_slice %53 {offsets = [8, 0], sizes = [1, 8], strides = [1, 1]} : vector<10x8xf32> to vector<1x8xf32>
    %95 = vector.broadcast %15 : vector<2x1xf32> to vector<2x8xf32>
    %96 = vector.broadcast %94 : vector<1x8xf32> to vector<2x8xf32>
    %97 = arith.mulf %95, %96 : vector<2x8xf32>
    %98 = arith.addf %93, %97 : vector<2x8xf32>
    %99 = vector.extract_strided_slice %53 {offsets = [9, 0], sizes = [1, 8], strides = [1, 1]} : vector<10x8xf32> to vector<1x8xf32>
    %100 = vector.broadcast %16 : vector<2x1xf32> to vector<2x8xf32>
    %101 = vector.broadcast %99 : vector<1x8xf32> to vector<2x8xf32>
    %102 = arith.mulf %100, %101 : vector<2x8xf32>
    %103 = arith.addf %98, %102 : vector<2x8xf32>
    %104 = math.absf %103 : vector<2x8xf32>
    %c0_5 = arith.constant 0 : index
    %c0_6 = arith.constant 0 : index
    %105 = vector.load %arg4[%c0_5, %c0_6] : memref<2x8xf32, #tpu.memory_space<vmem>>, vector<2x8xf32>
    tpu.vector_store %arg4[%c0_5, %c0_6], %104 {strides = array<i32>} : memref<2x8xf32, #tpu.memory_space<vmem>>, vector<2x8xf32>,
    return
  }
  func.func @transform_0(%arg0: i32) -> (i32, i32) {
    %c0_i32 = arith.constant 0 : i32
    %c0_i32_0 = arith.constant 0 : i32
    return %c0_i32, %arg0 : i32, i32
  }
  func.func @transform_1(%arg0: i32) -> (i32, i32) {
    %c0_i32 = arith.constant 0 : i32
    %c0_i32_0 = arith.constant 0 : i32
    %c0_i32_1 = arith.constant 0 : i32
    return %c0_i32, %c0_i32_0 : i32, i32
  }
  func.func @transform_2(%arg0: i32) -> (i32, i32) {
    %c0_i32 = arith.constant 0 : i32
    %c0_i32_0 = arith.constant 0 : i32
    %c0_i32_1 = arith.constant 0 : i32
    return %c0_i32, %c0_i32_0 : i32, i32
  }
  func.func @transform_3(%arg0: i32) -> (i32, i32) {
    %c0_i32 = arith.constant 0 : i32
    %c0_i32_0 = arith.constant 0 : i32
    return %c0_i32, %arg0 : i32, i32
  }
}

</mosaic_0001>

<llo_original>
// kernel: tpu_custom_call.1
$region0: #{tpu_custom_call.1}
  #allocation0 [shape = 'u32[]', space=smem, size = 0x4, offset = 0x4, fixed_abs, tag = 'smem constant byte address 0x4 - core index']
  #allocation1 [shape = 'u32[144,128]{1,0:T(1,128)}', space=vmem, size = 0x12000, scoped, tag = 'internal scratch']
  %s0 = inlined_call_operand.vmem [shape: f32[5,8], index: 0, kind: input, shape index: {}]
  %s1 = inlined_call_operand.vmem [shape: f32[10,6], index: 1, kind: input, shape index: {}]
  %s2 = inlined_call_operand.vmem [shape: f32[2,11], index: 2, kind: input, shape index: {}]
  %s3 = inlined_call_operand.hbm [shape: f32[2,8], index: 3, kind: output, shape index: {}]
  %s4 = sld [smem:[#allocation0]]
  $region22: #{tpu_custom_call.1} parent=0
    _
  %s6 = ssub.s32 1, %s4
  %s7 = scalar_select 0, %s6, %s4
  $region1: #{tpu_custom_call.1} parent=0
    #allocation2 [shape = 'u8[1024]{0}', space=vmem, size = 0x400, scoped, tag = 'output window, operand 0, single buffered']
    #allocation3 [shape = 's32[1]{0}', space=sflag, size = 0x4, scoped, tag = 'scoped memory for tpu_custom_call.1']
    %8 = vsyncpa [#allocation3], 0
    // Predicated region
    $region2: #{tpu_custom_call.1} parent=1 // pred_check
      _
    $region3: #{tpu_custom_call.1} parent=1 // pred_check_branch
      %10 = sbr.rel (0) target = $region5
    $region4: #{tpu_custom_call.1} parent=1 // pred_region
      _
    $region5: #{tpu_custom_call.1} parent=1 // pred_fallthru
      _
    // Predicated region
    $region6: #{tpu_custom_call.1} parent=1 // pred_check
      _
    $region7: #{tpu_custom_call.1} parent=1 // pred_check_branch
      %12 = sbr.rel (0) target = $region9
    $region8: #{tpu_custom_call.1} parent=1 // pred_region
      _
    $region9: #{tpu_custom_call.1} parent=1 // pred_fallthru
      _
    // Predicated region
    $region10: #{tpu_custom_call.1} parent=1 // pred_check
      _
    $region11: #{tpu_custom_call.1} parent=1 // pred_check_branch
      %14 = sbr.rel (0) target = $region13
    $region12: #{tpu_custom_call.1} parent=1 // pred_region
      _
    $region13: #{tpu_custom_call.1} parent=1 // pred_fallthru
      _
    %v15 = vld [vmem:[%s1] sm:$0xff]
    %v16 = vld [vmem:[%s1 + $0x8] sm:$0x3]
    %v17 = vld [vmem:[%s2] sm:$0x3]
    %19 = vset.pattern.permute.xlu0 5
    %20 = vperm.xlu0 %19, %v15
    %v21 = vpop.permute.xlu0 %20
    %24 = vset.pattern.permute.xlu0 5
    %25 = vperm.xlu0 %24, %v16
    %v26 = vpop.permute.xlu0 %25
    %29 = vset.pattern.permute.xlu0 10
    %30 = vperm.xlu0 %29, %v17
    %v31 = vpop.permute.xlu0 %30
    %v33 = vld [vmem:[%s0] sm:$0x1f]
    %34 = vset.pattern.permute.xlu0 0
    %35 = vperm.xlu0 %34, %v15
    %v36 = vpop.permute.xlu0 %35
    %38 = vset.pattern.permute.xlu0 0
    %39 = vperm.xlu0 %38, %v16
    %v40 = vpop.permute.xlu0 %39
    %v42 = vlaneseq
    %v43 = vshrl.u32 %v42, 7
    %v44 = vsub.s32 0, %v43
    %v45 = vrot.slane %v33, %v44
    %v46 = vmul.f32 %v36, %v45
    %v47 = vmul.f32 %v40, %v45
    %v48 = vadd.f32 %v21, %v46
    %v49 = vadd.f32 %v26, %v47
    %50 = vset.pattern.permute.xlu0 1
    %51 = vperm.xlu0 %50, %v15
    %v52 = vpop.permute.xlu0 %51
    %54 = vset.pattern.permute.xlu0 1
    %55 = vperm.xlu0 %54, %v16
    %v56 = vpop.permute.xlu0 %55
    %v58 = vlaneseq
    %v59 = vshrl.u32 %v58, 7
    %v60 = vsub.s32 1, %v59
    %v61 = vrot.slane %v33, %v60
    %v62 = vmul.f32 %v52, %v61
    %v63 = vmul.f32 %v56, %v61
    %v64 = vadd.f32 %v48, %v62
    %v65 = vadd.f32 %v49, %v63
    %66 = vset.pattern.permute.xlu0 2
    %67 = vperm.xlu0 %66, %v15
    %v68 = vpop.permute.xlu0 %67
    %70 = vset.pattern.permute.xlu0 2
    %71 = vperm.xlu0 %70, %v16
    %v72 = vpop.permute.xlu0 %71
    %v74 = vlaneseq
    %v75 = vshrl.u32 %v74, 7
    %v76 = vsub.s32 2, %v75
    %v77 = vrot.slane %v33, %v76
    %v78 = vmul.f32 %v68, %v77
    %v79 = vmul.f32 %v72, %v77
    %v80 = vadd.f32 %v64, %v78
    %v81 = vadd.f32 %v65, %v79
    %82 = vset.pattern.permute.xlu0 3
    %83 = vperm.xlu0 %82, %v15
    %v84 = vpop.permute.xlu0 %83
    %86 = vset.pattern.permute.xlu0 3
    %87 = vperm.xlu0 %86, %v16
    %v88 = vpop.permute.xlu0 %87
    %v90 = vlaneseq
    %v91 = vshrl.u32 %v90, 7
    %v92 = vsub.s32 3, %v91
    %v93 = vrot.slane %v33, %v92
    %v94 = vmul.f32 %v84, %v93
    %v95 = vmul.f32 %v88, %v93
    %v96 = vadd.f32 %v80, %v94
    %v97 = vadd.f32 %v81, %v95
    %98 = vset.pattern.permute.xlu0 4
    %99 = vperm.xlu0 %98, %v15
    %v100 = vpop.permute.xlu0 %99
    %102 = vset.pattern.permute.xlu0 4
    %103 = vperm.xlu0 %102, %v16
    %v104 = vpop.permute.xlu0 %103
    %v106 = vlaneseq
    %v107 = vshrl.u32 %v106, 7
    %v108 = vsub.s32 4, %v107
    %v109 = vrot.slane %v33, %v108
    %v110 = vmul.f32 %v100, %v109
    %v111 = vmul.f32 %v104, %v109
    %v112 = vadd.f32 %v96, %v110
    %v113 = vadd.f32 %v97, %v111
    %v114 = vxor.u32 %v112, 2147483648
    %v115 = vxor.u32 %v113, 2147483648
    %v116 = vmul.f32 %v114, 1.442695
    %v117 = vpow.pop %v116
    %v118 = vmul.f32 %v115, 1.442695
    %v119 = vpow.pop %v118
    %v120 = vadd.f32 %v117, 1.0
    %v121 = vadd.f32 %v119, 1.0
    %v122 = vrcp.pop %v120
    %v123 = vmul.f32 1.0, %v122
    %v124 = vrcp.pop %v121
    %v125 = vmul.f32 1.0, %v124
    %126 = vset.pattern.permute.xlu0 0
    %127 = vperm.xlu0 %126, %v17
    %v128 = vpop.permute.xlu0 %127
    %v130 = vlaneseq
    %v131 = vshrl.u32 %v130, 7
    %v132 = vsub.s32 0, %v131
    %v133 = vrot.slane %v123, %v132
    %v134 = vmul.f32 %v128, %v133
    %v135 = vadd.f32 %v31, %v134
    %136 = vset.pattern.permute.xlu0 1
    %137 = vperm.xlu0 %136, %v17
    %v138 = vpop.permute.xlu0 %137
    %v140 = vlaneseq
    %v141 = vshrl.u32 %v140, 7
    %v142 = vsub.s32 1, %v141
    %v143 = vrot.slane %v123, %v142
    %v144 = vmul.f32 %v138, %v143
    %v145 = vadd.f32 %v135, %v144
    %146 = vset.pattern.permute.xlu0 2
    %147 = vperm.xlu0 %146, %v17
    %v148 = vpop.permute.xlu0 %147
    %v150 = vlaneseq
    %v151 = vshrl.u32 %v150, 7
    %v152 = vsub.s32 2, %v151
    %v153 = vrot.slane %v123, %v152
    %v154 = vmul.f32 %v148, %v153
    %v155 = vadd.f32 %v145, %v154
    %156 = vset.pattern.permute.xlu0 3
    %157 = vperm.xlu0 %156, %v17
    %v158 = vpop.permute.xlu0 %157
    %v160 = vlaneseq
    %v161 = vshrl.u32 %v160, 7
    %v162 = vsub.s32 3, %v161
    %v163 = vrot.slane %v123, %v162
    %v164 = vmul.f32 %v158, %v163
    %v165 = vadd.f32 %v155, %v164
    %166 = vset.pattern.permute.xlu0 4
    %167 = vperm.xlu0 %166, %v17
    %v168 = vpop.permute.xlu0 %167
    %v170 = vlaneseq
    %v171 = vshrl.u32 %v170, 7
    %v172 = vsub.s32 4, %v171
    %v173 = vrot.slane %v123, %v172
    %v174 = vmul.f32 %v168, %v173
    %v175 = vadd.f32 %v165, %v174
    %176 = vset.pattern.permute.xlu0 5
    %177 = vperm.xlu0 %176, %v17
    %v178 = vpop.permute.xlu0 %177
    %v180 = vlaneseq
    %v181 = vshrl.u32 %v180, 7
    %v182 = vsub.s32 5, %v181
    %v183 = vrot.slane %v123, %v182
    %v184 = vmul.f32 %v178, %v183
    %v185 = vadd.f32 %v175, %v184
    %186 = vset.pattern.permute.xlu0 6
    %187 = vperm.xlu0 %186, %v17
    %v188 = vpop.permute.xlu0 %187
    %v190 = vlaneseq
    %v191 = vshrl.u32 %v190, 7
    %v192 = vsub.s32 6, %v191
    %v193 = vrot.slane %v123, %v192
    %v194 = vmul.f32 %v188, %v193
    %v195 = vadd.f32 %v185, %v194
    %196 = vset.pattern.permute.xlu0 7
    %197 = vperm.xlu0 %196, %v17
    %v198 = vpop.permute.xlu0 %197
    %v200 = vlaneseq
    %v201 = vshrl.u32 %v200, 7
    %v202 = vsub.s32 7, %v201
    %v203 = vrot.slane %v123, %v202
    %v204 = vmul.f32 %v198, %v203
    %v205 = vadd.f32 %v195, %v204
    %206 = vset.pattern.permute.xlu0 8
    %207 = vperm.xlu0 %206, %v17
    %v208 = vpop.permute.xlu0 %207
    %v210 = vlaneseq
    %v211 = vshrl.u32 %v210, 7
    %v212 = vsub.s32 0, %v211
    %v213 = vrot.slane %v125, %v212
    %v214 = vmul.f32 %v208, %v213
    %v215 = vadd.f32 %v205, %v214
    %216 = vset.pattern.permute.xlu0 9
    %217 = vperm.xlu0 %216, %v17
    %v218 = vpop.permute.xlu0 %217
    %v220 = vlaneseq
    %v221 = vshrl.u32 %v220, 7
    %v222 = vsub.s32 1, %v221
    %v223 = vrot.slane %v125, %v222
    %v224 = vmul.f32 %v218, %v223
    %v225 = vadd.f32 %v215, %v224
    %v226 = vand.u32 2147483647, %v225
    %vm227 = vcmask 58368
    %228 = vst.msk [vmem:[#allocation2] sm:$0x3] %vm227, %v226
    // Predicated region
    $region14: #{tpu_custom_call.1} parent=1 // pred_check
      _
    $region15: #{tpu_custom_call.1} parent=1 // pred_check_branch
      %230 = sbr.rel (0) target = $region17
    $region16: #{tpu_custom_call.1} parent=1 // pred_region
      %s232 = ssub.s32 32, 32
      %233 = vsyncadd [#allocation3], %s232
      %s235 = sshll.u32 [#allocation2], 4
      %s236 = int_to_ptr.vmem [resolvable:$true] %s235
      %238 = dma.vmem_to_hbm [thread:$0]  %s236, 32, %s3, [#allocation3]
    $region17: #{tpu_custom_call.1} parent=1 // pred_fallthru
      _
    // Predicated region
    $region18: #{tpu_custom_call.1} parent=1 // pred_check
      _
    $region19: #{tpu_custom_call.1} parent=1 // pred_check_branch
      %240 = sbr.rel (0) target = $region21
    $region20: #{tpu_custom_call.1} parent=1 // pred_region
      %241 = dma.done [#allocation3], 32
    $region21: #{tpu_custom_call.1} parent=1 // pred_fallthru
      _
    %242 = vsyncpa [#allocation3], 1

</llo_original>
